<compile_context>
chip_gen: v6e
topology: v6e:2x2x1
jax: 0.10.0
libtpu: 0.0.40
codegen_flags: <defaults>
</compile_context>

<pallas_src>
import jax
import jax.numpy as jnp
from jax import lax
from jax.experimental import pallas as pl
from jax.experimental.pallas import tpu as pltpu


def _round_up(n, m):
    return ((n + m - 1) // m) * m


def _layernorm_onepass(x, gamma, beta, eps=1e-5):
    """LayerNorm over the last axis, one-pass variance (two independent XLU
    reductions on the same input; rsqrt stays on the EUP)."""
    mean = jnp.mean(x, axis=-1, keepdims=True)
    msq = jnp.mean(x * x, axis=-1, keepdims=True)
    var = jnp.maximum(msq - mean * mean, 0.0)
    inv = lax.rsqrt(var + eps)
    return (x - mean) * inv * gamma + beta


def _lstm_seq_kernel(x_ref, h0_ref, c0_ref, wf_ref,
                     bx_ref, bh_ref,
                     g_ih_ref, b_ih_ref, g_hh_ref, b_hh_ref,
                     g_c_ref, b_c_ref,
                     out_ref,
                     h_st, c_st):
    H = c0_ref.shape[1]
    H4 = 4 * H

    # Initialize the VMEM-resident state on the first grid step only.
    @pl.when(pl.program_id(0) == 0)
    def _():
        h_st[...] = h0_ref[...]
        c_st[...] = c0_ref[...]

    x_t = x_ref[0]                                   # (B, Hin) f32
    # Fused matmul: [x | h] @ [[W_ih, 0], [0, W_hh]] -> (B, 8H), f32 accumulate.
    xh = jnp.concatenate([x_t, h_st[...]], axis=-1).astype(jnp.bfloat16)
    fused = jnp.dot(xh, wf_ref[...], preferred_element_type=jnp.float32)

    wi = fused[:, :H4] + bx_ref[...]                 # lanes [0, 4H)
    wh = fused[:, H4:] + bh_ref[...]                 # lanes [4H, 8H)

    nwi = _layernorm_onepass(wi, g_ih_ref[...], b_ih_ref[...])
    nwh = _layernorm_onepass(wh, g_hh_ref[...], b_hh_ref[...])
    gates = nwi + nwh                                # (B, 4H)

    # One full-vreg sigmoid, then slice f/i/o; tanh only on the g chunk.
    sig = jax.nn.sigmoid(gates)
    f = sig[:, 0 * H:1 * H]
    i = sig[:, 1 * H:2 * H]
    o = sig[:, 2 * H:3 * H]
    g = jnp.tanh(gates[:, 3 * H:4 * H])

    c1 = f * c_st[...] + i * g
    nc1 = _layernorm_onepass(c1, g_c_ref[...], b_c_ref[...])
    h1 = o * jnp.tanh(nc1)

    # Carry state for the next timestep.
    h_st[...] = h1
    c_st[...] = c1

    # Lane-dense packed output: [h | c | zero-pad] stored as one full-width vst.
    B = c1.shape[0]
    P = out_ref.shape[-1]
    pad = P - 2 * H
    pieces = [h1, c1]
    if pad > 0:
        pieces.append(jnp.zeros((B, pad), jnp.float32))
    out_ref[0] = jnp.concatenate(pieces, axis=-1).astype(out_ref.dtype)


def normalized_lstm_sequence(x_seq, h0, c0, params):
    """Run T LSTM-cell steps in one pallas_call (grid over T, state in VMEM).

    Returns (h_seq, c_seq) each of shape (T, B, H).
    """
    T, B, Hin = x_seq.shape
    H = c0.shape[1]
    H4 = 4 * H
    K = Hin + H
    P = _round_up(2 * H, 128)            # lane-dense packed output width

    # Block-diagonal fused weight, cast once to bf16 for the MXU.
    wf = jnp.zeros((K, 2 * H4), jnp.float32)
    wf = wf.at[:Hin, :H4].set(params["weight_ih"])
    wf = wf.at[Hin:, H4:].set(params["weight_hh"])
    wf = wf.astype(jnp.bfloat16)

    def row(v):
        return v.reshape(1, -1)

    args = (
        x_seq, h0, c0, wf,
        row(params["bias_x"]), row(params["bias_h"]),
        row(params["ln_ih_g"]), row(params["ln_ih_b"]),
        row(params["ln_hh_g"]), row(params["ln_hh_b"]),
        row(params["ln_c_g"]), row(params["ln_c_b"]),
    )

    def resident(shape):
        # Constant index_map -> block DMA'd once, stays resident across T steps.
        return pl.BlockSpec(shape, lambda t: (0,) * len(shape))

    in_specs = [
        pl.BlockSpec((1, B, Hin), lambda t: (t, 0, 0)),   # stream x[t]
        resident((B, H)), resident((B, H)),               # h0, c0
        resident((K, 2 * H4)),                            # fused weights
        resident((1, H4)), resident((1, H4)),             # bias_x, bias_h
        resident((1, H4)), resident((1, H4)),             # ln_ih gamma/beta
        resident((1, H4)), resident((1, H4)),             # ln_hh gamma/beta
        resident((1, H)), resident((1, H)),               # ln_c gamma/beta
    ]
    out_spec = pl.BlockSpec((1, B, P), lambda t: (t, 0, 0))

    out = pl.pallas_call(
        _lstm_seq_kernel,
        out_shape=jax.ShapeDtypeStruct((T, B, P), jnp.float32),
        grid_spec=pltpu.PrefetchScalarGridSpec(
            num_scalar_prefetch=0,
            grid=(T,),
            in_specs=in_specs,
            out_specs=out_spec,
            scratch_shapes=[pltpu.VMEM((B, H), jnp.float32),   # h state
                            pltpu.VMEM((B, H), jnp.float32)],  # c state
        ),
        compiler_params=pltpu.CompilerParams(
            dimension_semantics=("arbitrary",)),   # sequential recurrence over T
    )(*args)

    h_seq = out[:, :, :H]
    c_seq = out[:, :, H:2 * H]
    return h_seq, c_seq


def normalized_lstm_cell(input_, hx, params):
    """Single-step forward matching Normalized_LSTMCell.forward (T=1)."""
    h0, c0 = hx
    h_seq, c_seq = normalized_lstm_sequence(input_[None], h0, c0, params)
    return h_seq[0], c_seq[0]


# -------------------- parameter init & pure-JAX references --------------------

def make_params(key, input_size, hidden_size):
    """Deterministic parameter init mirroring reset_parameters()."""
    H4 = 4 * hidden_size
    # orthogonal init for weight_ih (input_size, 4H): orthonormal rows via QR.
    a = jax.random.normal(key, (H4, input_size), dtype=jnp.float32)
    q, _ = jnp.linalg.qr(a)                      # (4H, input_size), orthonormal cols
    weight_ih = q[:, :input_size].T              # (input_size, 4H) orthonormal rows
    weight_hh = jnp.tile(jnp.eye(hidden_size, dtype=jnp.float32), (1, 4))
    return {
        "weight_ih": weight_ih.astype(jnp.float32),
        "weight_hh": weight_hh,
        "bias_h": jnp.zeros((H4,), jnp.float32),
        "bias_x": jnp.zeros((H4,), jnp.float32),
        # nn.LayerNorm defaults: gamma=1, beta=0
        "ln_hh_g": jnp.ones((H4,), jnp.float32),
        "ln_hh_b": jnp.zeros((H4,), jnp.float32),
        "ln_ih_g": jnp.ones((H4,), jnp.float32),
        "ln_ih_b": jnp.zeros((H4,), jnp.float32),
        "ln_c_g": jnp.ones((hidden_size,), jnp.float32),
        "ln_c_b": jnp.zeros((hidden_size,), jnp.float32),
    }


def _layernorm_ref(x, gamma, beta, eps=1e-5):
    """Two-pass LayerNorm reference (nn.LayerNorm semantics)."""
    mean = jnp.mean(x, axis=-1, keepdims=True)
    var = jnp.mean((x - mean) ** 2, axis=-1, keepdims=True)
    return (x - mean) * lax.rsqrt(var + eps) * gamma[None, :] + beta[None, :]


def reference_cell(x, h, c, params):
    """Pure-JAX reference of the PyTorch forward (LayerNorm path).
    Matmul inputs are cast to bf16 to mirror the kernel's MXU input precision
    (accumulation in f32, all other math in f32)."""
    H = c.shape[1]
    wi = jnp.dot(x.astype(jnp.bfloat16), params["weight_ih"].astype(jnp.bfloat16),
                 preferred_element_type=jnp.float32) + params["bias_x"][None, :]
    wh = jnp.dot(h.astype(jnp.bfloat16), params["weight_hh"].astype(jnp.bfloat16),
                 preferred_element_type=jnp.float32) + params["bias_h"][None, :]
    nwi = _layernorm_ref(wi, params["ln_ih_g"], params["ln_ih_b"])
    nwh = _layernorm_ref(wh, params["ln_hh_g"], params["ln_hh_b"])
    gates = nwi + nwh
    f, i, o, g = (gates[:, k * H:(k + 1) * H] for k in range(4))
    c1 = jax.nn.sigmoid(f) * c + jax.nn.sigmoid(i) * jnp.tanh(g)
    h1 = jax.nn.sigmoid(o) * jnp.tanh(
        _layernorm_ref(c1, params["ln_c_g"], params["ln_c_b"]))
    return h1, c1


def reference_sequence(x_seq, h0, c0, params):
    def step(carry, x):
        h, c = carry
        h1, c1 = reference_cell(x, h, c, params)
        return (h1, c1), (h1, c1)
    _, (hs, cs) = lax.scan(step, (h0, c0), x_seq)
    return hs, cs


if __name__ == "__main__":
    batch = 8
    input_size = 16
    hidden_size = 32
    seq_len = 8

    key = jax.random.PRNGKey(0)
    k_p, k_x, k_h, k_c = jax.random.split(key, 4)

    params = make_params(k_p, input_size, hidden_size)
    x_seq = jax.random.normal(k_x, (seq_len, batch, input_size), dtype=jnp.float32)
    h0 = jax.random.normal(k_h, (batch, hidden_size), dtype=jnp.float32)
    c0 = jax.random.normal(k_c, (batch, hidden_size), dtype=jnp.float32)

    # Single-step forward (the module's semantics): T=1 through the kernel.
    h1, c1 = normalized_lstm_cell(x_seq[0], (h0, c0), params)
    jax.block_until_ready((h1, c1))
    h1_ref, c1_ref = reference_cell(x_seq[0], h0, c0, params)
    assert jnp.allclose(h1, h1_ref, atol=1e-4, rtol=1e-4)
    assert jnp.allclose(c1, c1_ref, atol=1e-4, rtol=1e-4)

    # Multi-step: recurrence runs inside the kernel (grid over T, state in VMEM).
    h_seq, c_seq = normalized_lstm_sequence(x_seq, h0, c0, params)
    jax.block_until_ready((h_seq, c_seq))
    h_seq_ref, c_seq_ref = reference_sequence(x_seq, h0, c0, params)
    assert jnp.allclose(h_seq, h_seq_ref, atol=1e-3, rtol=1e-3)
    assert jnp.allclose(c_seq, c_seq_ref, atol=1e-3, rtol=1e-3)

    print("KERNEL_OK")
</pallas_src>

<mosaic_0001>
module attributes {stable_mosaic.version = 11 : i64} {
  func.func @_lstm_seq_kernel(%arg0: i32, %arg1: memref<1x8x16xf32, #tpu.memory_space<vmem>>, %arg2: memref<8x32xf32, #tpu.memory_space<vmem>>, %arg3: memref<8x32xf32, #tpu.memory_space<vmem>>, %arg4: memref<48x256xbf16, #tpu.memory_space<vmem>>, %arg5: memref<1x128xf32, #tpu.memory_space<vmem>>, %arg6: memref<1x128xf32, #tpu.memory_space<vmem>>, %arg7: memref<1x128xf32, #tpu.memory_space<vmem>>, %arg8: memref<1x128xf32, #tpu.memory_space<vmem>>, %arg9: memref<1x128xf32, #tpu.memory_space<vmem>>, %arg10: memref<1x128xf32, #tpu.memory_space<vmem>>, %arg11: memref<1x32xf32, #tpu.memory_space<vmem>>, %arg12: memref<1x32xf32, #tpu.memory_space<vmem>>, %arg13: memref<1x8x128xf32, #tpu.memory_space<vmem>>, %arg14: memref<8x32xf32, #tpu.memory_space<vmem>>, %arg15: memref<8x32xf32, #tpu.memory_space<vmem>>) attributes {dimension_semantics = [#tpu.dimension_semantics<arbitrary>], iteration_bounds = array<i64: 1>, scalar_prefetch = 0 : i64, scratch_operands = 2 : i64, tpu.core_type = #tpu.core_type<tc>, window_params = [{transform_indices = @transform_0, window_bounds = array<i64: 1, 8, 16>}, {pipeline_mode = #tpu.pipeline_mode<synchronous>, transform_indices = @transform_1, window_bounds = array<i64: 8, 32>}, {pipeline_mode = #tpu.pipeline_mode<synchronous>, transform_indices = @transform_2, window_bounds = array<i64: 8, 32>}, {pipeline_mode = #tpu.pipeline_mode<synchronous>, transform_indices = @transform_3, window_bounds = array<i64: 48, 256>}, {pipeline_mode = #tpu.pipeline_mode<synchronous>, transform_indices = @transform_4, window_bounds = array<i64: 1, 128>}, {pipeline_mode = #tpu.pipeline_mode<synchronous>, transform_indices = @transform_5, window_bounds = array<i64: 1, 128>}, {pipeline_mode = #tpu.pipeline_mode<synchronous>, transform_indices = @transform_6, window_bounds = array<i64: 1, 128>}, {pipeline_mode = #tpu.pipeline_mode<synchronous>, transform_indices = @transform_7, window_bounds = array<i64: 1, 128>}, {pipeline_mode = #tpu.pipeline_mode<synchronous>, transform_indices = @transform_8, window_bounds = array<i64: 1, 128>}, {pipeline_mode = #tpu.pipeline_mode<synchronous>, transform_indices = @transform_9, window_bounds = array<i64: 1, 128>}, {pipeline_mode = #tpu.pipeline_mode<synchronous>, transform_indices = @transform_10, window_bounds = array<i64: 1, 32>}, {pipeline_mode = #tpu.pipeline_mode<synchronous>, transform_indices = @transform_11, window_bounds = array<i64: 1, 32>}, {transform_indices = @transform_12, window_bounds = array<i64: 1, 8, 128>}]} {
    %c0_i32 = arith.constant 0 : i32
    %0 = arith.cmpi eq, %arg0, %c0_i32 : i32
    %1 = arith.extui %0 : i1 to i32
    %c0_i32_0 = arith.constant 0 : i32
    %2 = arith.cmpi ne, %1, %c0_i32_0 : i32
    scf.if %2 {
      %c0_52 = arith.constant 0 : index
      %c0_53 = arith.constant 0 : index
      %120 = vector.load %arg2[%c0_52, %c0_53] : memref<8x32xf32, #tpu.memory_space<vmem>>, vector<8x32xf32>
      %c0_54 = arith.constant 0 : index
      %c0_55 = arith.constant 0 : index
      %121 = vector.load %arg14[%c0_54, %c0_55] : memref<8x32xf32, #tpu.memory_space<vmem>>, vector<8x32xf32>
      tpu.vector_store %arg14[%c0_54, %c0_55], %120 {strides = array<i32>} : memref<8x32xf32, #tpu.memory_space<vmem>>, vector<8x32xf32>,
      %c0_56 = arith.constant 0 : index
      %c0_57 = arith.constant 0 : index
      %122 = vector.load %arg3[%c0_56, %c0_57] : memref<8x32xf32, #tpu.memory_space<vmem>>, vector<8x32xf32>
      %c0_58 = arith.constant 0 : index
      %c0_59 = arith.constant 0 : index
      %123 = vector.load %arg15[%c0_58, %c0_59] : memref<8x32xf32, #tpu.memory_space<vmem>>, vector<8x32xf32>
      tpu.vector_store %arg15[%c0_58, %c0_59], %122 {strides = array<i32>} : memref<8x32xf32, #tpu.memory_space<vmem>>, vector<8x32xf32>,
    } else {
    }
    %c0 = arith.constant 0 : index
    %c0_1 = arith.constant 0 : index
    %c0_2 = arith.constant 0 : index
    %3 = vector.load %arg1[%c0, %c0_1, %c0_2] : memref<1x8x16xf32, #tpu.memory_space<vmem>>, vector<1x8x16xf32>
    %4 = vector.shape_cast %3 : vector<1x8x16xf32> to vector<8x16xf32>
    %c0_3 = arith.constant 0 : index
    %c0_4 = arith.constant 0 : index
    %5 = vector.load %arg14[%c0_3, %c0_4] : memref<8x32xf32, #tpu.memory_space<vmem>>, vector<8x32xf32>
    %6 = tpu.concatenate %4, %5 in 1 : vector<8x16xf32>, vector<8x32xf32> -> vector<8x48xf32>
    %7 = arith.truncf %6 : vector<8x48xf32> to vector<8x48xbf16>
    %c0_5 = arith.constant 0 : index
    %c0_6 = arith.constant 0 : index
    %8 = vector.load %arg4[%c0_5, %c0_6] : memref<48x256xbf16, #tpu.memory_space<vmem>>, vector<48x256xbf16>
    %cst = arith.constant dense<0.000000e+00> : vector<8x256xf32>
    %9 = tpu.matmul %7, %8, %cst {dimension_numbers = #tpu.dot_dimension_numbers<[1], [0], [0], [1], [0, 0, 1, 1], [], []>} : vector<8x48xbf16>, vector<48x256xbf16>, vector<8x256xf32> -> vector<8x256xf32>
    %10 = vector.extract_strided_slice %9 {offsets = [0, 0], sizes = [8, 128], strides = [1, 1]} : vector<8x256xf32> to vector<8x128xf32>
    %c0_7 = arith.constant 0 : index
    %c0_8 = arith.constant 0 : index
    %11 = vector.load %arg5[%c0_7, %c0_8] : memref<1x128xf32, #tpu.memory_space<vmem>>, vector<1x128xf32>
    %12 = vector.broadcast %11 : vector<1x128xf32> to vector<8x128xf32>
    %13 = arith.addf %10, %12 : vector<8x128xf32>
    %14 = vector.extract_strided_slice %9 {offsets = [0, 128], sizes = [8, 128], strides = [1, 1]} : vector<8x256xf32> to vector<8x128xf32>
    %c0_9 = arith.constant 0 : index
    %c0_10 = arith.constant 0 : index
    %15 = vector.load %arg6[%c0_9, %c0_10] : memref<1x128xf32, #tpu.memory_space<vmem>>, vector<1x128xf32>
    %16 = vector.broadcast %15 : vector<1x128xf32> to vector<8x128xf32>
    %17 = arith.addf %14, %16 : vector<8x128xf32>
    %c0_11 = arith.constant 0 : index
    %c0_12 = arith.constant 0 : index
    %18 = vector.load %arg7[%c0_11, %c0_12] : memref<1x128xf32, #tpu.memory_space<vmem>>, vector<1x128xf32>
    %c0_13 = arith.constant 0 : index
    %c0_14 = arith.constant 0 : index
    %19 = vector.load %arg8[%c0_13, %c0_14] : memref<1x128xf32, #tpu.memory_space<vmem>>, vector<1x128xf32>
    %cst_15 = arith.constant dense<0.000000e+00> : vector<8xf32>
    %20 = vector.multi_reduction <add>, %13, %cst_15 [1] : vector<8x128xf32> to vector<8xf32>
    %21 = vector.shape_cast %20 : vector<8xf32> to vector<8x1xf32>
    %cst_16 = arith.constant 1.280000e+02 : f32
    %22 = vector.broadcast %cst_16 : f32 to vector<8x1xf32>
    %23 = arith.divf %21, %22 : vector<8x1xf32>
    %24 = arith.mulf %13, %13 : vector<8x128xf32>
    %cst_17 = arith.constant dense<0.000000e+00> : vector<8xf32>
    %25 = vector.multi_reduction <add>, %24, %cst_17 [1] : vector<8x128xf32> to vector<8xf32>
    %26 = vector.shape_cast %25 : vector<8xf32> to vector<8x1xf32>
    %cst_18 = arith.constant 1.280000e+02 : f32
    %27 = vector.broadcast %cst_18 : f32 to vector<8x1xf32>
    %28 = arith.divf %26, %27 : vector<8x1xf32>
    %29 = arith.mulf %23, %23 : vector<8x1xf32>
    %30 = arith.subf %28, %29 : vector<8x1xf32>
    %cst_19 = arith.constant 0.000000e+00 : f32
    %31 = vector.broadcast %cst_19 : f32 to vector<8x1xf32>
    %32 = arith.maximumf %30, %31 : vector<8x1xf32>
    %cst_20 = arith.constant 9.99999974E-6 : f32
    %33 = vector.broadcast %cst_20 : f32 to vector<8x1xf32>
    %34 = arith.addf %32, %33 : vector<8x1xf32>
    %35 = math.rsqrt %34 : vector<8x1xf32>
    %36 = vector.broadcast %23 : vector<8x1xf32> to vector<8x128xf32>
    %37 = arith.subf %13, %36 : vector<8x128xf32>
    %38 = vector.broadcast %35 : vector<8x1xf32> to vector<8x128xf32>
    %39 = arith.mulf %37, %38 : vector<8x128xf32>
    %40 = vector.broadcast %18 : vector<1x128xf32> to vector<8x128xf32>
    %41 = arith.mulf %39, %40 : vector<8x128xf32>
    %42 = vector.broadcast %19 : vector<1x128xf32> to vector<8x128xf32>
    %43 = arith.addf %41, %42 : vector<8x128xf32>
    %c0_21 = arith.constant 0 : index
    %c0_22 = arith.constant 0 : index
    %44 = vector.load %arg9[%c0_21, %c0_22] : memref<1x128xf32, #tpu.memory_space<vmem>>, vector<1x128xf32>
    %c0_23 = arith.constant 0 : index
    %c0_24 = arith.constant 0 : index
    %45 = vector.load %arg10[%c0_23, %c0_24] : memref<1x128xf32, #tpu.memory_space<vmem>>, vector<1x128xf32>
    %cst_25 = arith.constant dense<0.000000e+00> : vector<8xf32>
    %46 = vector.multi_reduction <add>, %17, %cst_25 [1] : vector<8x128xf32> to vector<8xf32>
    %47 = vector.shape_cast %46 : vector<8xf32> to vector<8x1xf32>
    %cst_26 = arith.constant 1.280000e+02 : f32
    %48 = vector.broadcast %cst_26 : f32 to vector<8x1xf32>
    %49 = arith.divf %47, %48 : vector<8x1xf32>
    %50 = arith.mulf %17, %17 : vector<8x128xf32>
    %cst_27 = arith.constant dense<0.000000e+00> : vector<8xf32>
    %51 = vector.multi_reduction <add>, %50, %cst_27 [1] : vector<8x128xf32> to vector<8xf32>
    %52 = vector.shape_cast %51 : vector<8xf32> to vector<8x1xf32>
    %cst_28 = arith.constant 1.280000e+02 : f32
    %53 = vector.broadcast %cst_28 : f32 to vector<8x1xf32>
    %54 = arith.divf %52, %53 : vector<8x1xf32>
    %55 = arith.mulf %49, %49 : vector<8x1xf32>
    %56 = arith.subf %54, %55 : vector<8x1xf32>
    %cst_29 = arith.constant 0.000000e+00 : f32
    %57 = vector.broadcast %cst_29 : f32 to vector<8x1xf32>
    %58 = arith.maximumf %56, %57 : vector<8x1xf32>
    %cst_30 = arith.constant 9.99999974E-6 : f32
    %59 = vector.broadcast %cst_30 : f32 to vector<8x1xf32>
    %60 = arith.addf %58, %59 : vector<8x1xf32>
    %61 = math.rsqrt %60 : vector<8x1xf32>
    %62 = vector.broadcast %49 : vector<8x1xf32> to vector<8x128xf32>
    %63 = arith.subf %17, %62 : vector<8x128xf32>
    %64 = vector.broadcast %61 : vector<8x1xf32> to vector<8x128xf32>
    %65 = arith.mulf %63, %64 : vector<8x128xf32>
    %66 = vector.broadcast %44 : vector<1x128xf32> to vector<8x128xf32>
    %67 = arith.mulf %65, %66 : vector<8x128xf32>
    %68 = vector.broadcast %45 : vector<1x128xf32> to vector<8x128xf32>
    %69 = arith.addf %67, %68 : vector<8x128xf32>
    %70 = arith.addf %43, %69 : vector<8x128xf32>
    %71 = arith.negf %70 : vector<8x128xf32>
    %72 = math.exp %71 : vector<8x128xf32>
    %cst_31 = arith.constant 1.000000e+00 : f32
    %73 = vector.broadcast %cst_31 : f32 to vector<8x128xf32>
    %74 = arith.addf %73, %72 : vector<8x128xf32>
    %75 = arith.divf %73, %74 : vector<8x128xf32>
    %76 = vector.extract_strided_slice %75 {offsets = [0, 0], sizes = [8, 32], strides = [1, 1]} : vector<8x128xf32> to vector<8x32xf32>
    %77 = vector.extract_strided_slice %75 {offsets = [0, 32], sizes = [8, 32], strides = [1, 1]} : vector<8x128xf32> to vector<8x32xf32>
    %78 = vector.extract_strided_slice %75 {offsets = [0, 64], sizes = [8, 32], strides = [1, 1]} : vector<8x128xf32> to vector<8x32xf32>
    %79 = vector.extract_strided_slice %70 {offsets = [0, 96], sizes = [8, 32], strides = [1, 1]} : vector<8x128xf32> to vector<8x32xf32>
    %80 = math.tanh %79 : vector<8x32xf32>
    %c0_32 = arith.constant 0 : index
    %c0_33 = arith.constant 0 : index
    %81 = vector.load %arg15[%c0_32, %c0_33] : memref<8x32xf32, #tpu.memory_space<vmem>>, vector<8x32xf32>
    %82 = arith.mulf %76, %81 : vector<8x32xf32>
    %83 = arith.mulf %77, %80 : vector<8x32xf32>
    %84 = arith.addf %82, %83 : vector<8x32xf32>
    %c0_34 = arith.constant 0 : index
    %c0_35 = arith.constant 0 : index
    %85 = vector.load %arg11[%c0_34, %c0_35] : memref<1x32xf32, #tpu.memory_space<vmem>>, vector<1x32xf32>
    %c0_36 = arith.constant 0 : index
    %c0_37 = arith.constant 0 : index
    %86 = vector.load %arg12[%c0_36, %c0_37] : memref<1x32xf32, #tpu.memory_space<vmem>>, vector<1x32xf32>
    %cst_38 = arith.constant dense<0.000000e+00> : vector<8xf32>
    %87 = vector.multi_reduction <add>, %84, %cst_38 [1] : vector<8x32xf32> to vector<8xf32>
    %88 = vector.shape_cast %87 : vector<8xf32> to vector<8x1xf32>
    %cst_39 = arith.constant 3.200000e+01 : f32
    %89 = vector.broadcast %cst_39 : f32 to vector<8x1xf32>
    %90 = arith.divf %88, %89 : vector<8x1xf32>
    %91 = arith.mulf %84, %84 : vector<8x32xf32>
    %cst_40 = arith.constant dense<0.000000e+00> : vector<8xf32>
    %92 = vector.multi_reduction <add>, %91, %cst_40 [1] : vector<8x32xf32> to vector<8xf32>
    %93 = vector.shape_cast %92 : vector<8xf32> to vector<8x1xf32>
    %cst_41 = arith.constant 3.200000e+01 : f32
    %94 = vector.broadcast %cst_41 : f32 to vector<8x1xf32>
    %95 = arith.divf %93, %94 : vector<8x1xf32>
    %96 = arith.mulf %90, %90 : vector<8x1xf32>
    %97 = arith.subf %95, %96 : vector<8x1xf32>
    %cst_42 = arith.constant 0.000000e+00 : f32
    %98 = vector.broadcast %cst_42 : f32 to vector<8x1xf32>
    %99 = arith.maximumf %97, %98 : vector<8x1xf32>
    %cst_43 = arith.constant 9.99999974E-6 : f32
    %100 = vector.broadcast %cst_43 : f32 to vector<8x1xf32>
    %101 = arith.addf %99, %100 : vector<8x1xf32>
    %102 = math.rsqrt %101 : vector<8x1xf32>
    %103 = vector.broadcast %90 : vector<8x1xf32> to vector<8x32xf32>
    %104 = arith.subf %84, %103 : vector<8x32xf32>
    %105 = vector.broadcast %102 : vector<8x1xf32> to vector<8x32xf32>
    %106 = arith.mulf %104, %105 : vector<8x32xf32>
    %107 = vector.broadcast %85 : vector<1x32xf32> to vector<8x32xf32>
    %108 = arith.mulf %106, %107 : vector<8x32xf32>
    %109 = vector.broadcast %86 : vector<1x32xf32> to vector<8x32xf32>
    %110 = arith.addf %108, %109 : vector<8x32xf32>
    %111 = math.tanh %110 : vector<8x32xf32>
    %112 = arith.mulf %78, %111 : vector<8x32xf32>
    %c0_44 = arith.constant 0 : index
    %c0_45 = arith.constant 0 : index
    %113 = vector.load %arg14[%c0_44, %c0_45] : memref<8x32xf32, #tpu.memory_space<vmem>>, vector<8x32xf32>
    tpu.vector_store %arg14[%c0_44, %c0_45], %112 {strides = array<i32>} : memref<8x32xf32, #tpu.memory_space<vmem>>, vector<8x32xf32>,
    %c0_46 = arith.constant 0 : index
    %c0_47 = arith.constant 0 : index
    %114 = vector.load %arg15[%c0_46, %c0_47] : memref<8x32xf32, #tpu.memory_space<vmem>>, vector<8x32xf32>
    tpu.vector_store %arg15[%c0_46, %c0_47], %84 {strides = array<i32>} : memref<8x32xf32, #tpu.memory_space<vmem>>, vector<8x32xf32>,
    %cst_48 = arith.constant 0.000000e+00 : f32
    %115 = vector.broadcast %cst_48 : f32 to vector<8x64xf32>
    %116 = tpu.concatenate %112, %84, %115 in 1 : vector<8x32xf32>, vector<8x32xf32>, vector<8x64xf32> -> vector<8x128xf32>
    %c0_49 = arith.constant 0 : index
    %c0_50 = arith.constant 0 : index
    %c0_51 = arith.constant 0 : index
    %117 = vector.load %arg13[%c0_49, %c0_50, %c0_51] : memref<1x8x128xf32, #tpu.memory_space<vmem>>, vector<1x8x128xf32>
    %118 = vector.shape_cast %117 : vector<1x8x128xf32> to vector<8x128xf32>
    %119 = vector.shape_cast %116 : vector<8x128xf32> to vector<1x8x128xf32>
    tpu.vector_store %arg13[%c0_49, %c0_50, %c0_51], %119 {strides = array<i32>} : memref<1x8x128xf32, #tpu.memory_space<vmem>>, vector<1x8x128xf32>,
    return
  }
  func.func @transform_0(%arg0: i32) -> (i32, i32, i32) {
    %c0_i32 = arith.constant 0 : i32
    %c0_i32_0 = arith.constant 0 : i32
    %c0_i32_1 = arith.constant 0 : i32
    return %arg0, %c0_i32, %c0_i32_0 : i32, i32, i32
  }
  func.func @transform_1(%arg0: i32) -> (i32, i32) {
    %c0_i32 = arith.constant 0 : i32
    %c0_i32_0 = arith.constant 0 : i32
    %c0_i32_1 = arith.constant 0 : i32
    return %c0_i32, %c0_i32_0 : i32, i32
  }
  func.func @transform_2(%arg0: i32) -> (i32, i32) {
    %c0_i32 = arith.constant 0 : i32
    %c0_i32_0 = arith.constant 0 : i32
    %c0_i32_1 = arith.constant 0 : i32
    return %c0_i32, %c0_i32_0 : i32, i32
  }
  func.func @transform_3(%arg0: i32) -> (i32, i32) {
    %c0_i32 = arith.constant 0 : i32
    %c0_i32_0 = arith.constant 0 : i32
    %c0_i32_1 = arith.constant 0 : i32
    return %c0_i32, %c0_i32_0 : i32, i32
  }
  func.func @transform_4(%arg0: i32) -> (i32, i32) {
    %c0_i32 = arith.constant 0 : i32
    %c0_i32_0 = arith.constant 0 : i32
    %c0_i32_1 = arith.constant 0 : i32
    return %c0_i32, %c0_i32_0 : i32, i32
  }
  func.func @transform_5(%arg0: i32) -> (i32, i32) {
    %c0_i32 = arith.constant 0 : i32
    %c0_i32_0 = arith.constant 0 : i32
    %c0_i32_1 = arith.constant 0 : i32
    return %c0_i32, %c0_i32_0 : i32, i32
  }
  func.func @transform_6(%arg0: i32) -> (i32, i32) {
    %c0_i32 = arith.constant 0 : i32
    %c0_i32_0 = arith.constant 0 : i32
    %c0_i32_1 = arith.constant 0 : i32
    return %c0_i32, %c0_i32_0 : i32, i32
  }
  func.func @transform_7(%arg0: i32) -> (i32, i32) {
    %c0_i32 = arith.constant 0 : i32
    %c0_i32_0 = arith.constant 0 : i32
    %c0_i32_1 = arith.constant 0 : i32
    return %c0_i32, %c0_i32_0 : i32, i32
  }
  func.func @transform_8(%arg0: i32) -> (i32, i32) {
    %c0_i32 = arith.constant 0 : i32
    %c0_i32_0 = arith.constant 0 : i32
    %c0_i32_1 = arith.constant 0 : i32
    return %c0_i32, %c0_i32_0 : i32, i32
  }
  func.func @transform_9(%arg0: i32) -> (i32, i32) {
    %c0_i32 = arith.constant 0 : i32
    %c0_i32_0 = arith.constant 0 : i32
    %c0_i32_1 = arith.constant 0 : i32
    return %c0_i32, %c0_i32_0 : i32, i32
  }
  func.func @transform_10(%arg0: i32) -> (i32, i32) {
    %c0_i32 = arith.constant 0 : i32
    %c0_i32_0 = arith.constant 0 : i32
    %c0_i32_1 = arith.constant 0 : i32
    return %c0_i32, %c0_i32_0 : i32, i32
  }
  func.func @transform_11(%arg0: i32) -> (i32, i32) {
    %c0_i32 = arith.constant 0 : i32
    %c0_i32_0 = arith.constant 0 : i32
    %c0_i32_1 = arith.constant 0 : i32
    return %c0_i32, %c0_i32_0 : i32, i32
  }
  func.func @transform_12(%arg0: i32) -> (i32, i32, i32) {
    %c0_i32 = arith.constant 0 : i32
    %c0_i32_0 = arith.constant 0 : i32
    %c0_i32_1 = arith.constant 0 : i32
    return %arg0, %c0_i32, %c0_i32_0 : i32, i32, i32
  }
}

</mosaic_0001>

<llo_original>
// kernel: tpu_custom_call.1
$region0: #{tpu_custom_call.1}
  #allocation0 [shape = 'u32[]', space=smem, size = 0x4, offset = 0x4, fixed_abs, tag = 'smem constant byte address 0x4 - core index']
  #allocation1 [shape = 'u32[144,128]{1,0:T(1,128)}', space=vmem, size = 0x12000, scoped, tag = 'internal scratch']
  #allocation2 [shape = 'f32[8,32]{1,0:T(8,128)}', space=vmem, size = 0x1000, scoped, tag = 'scratch operand']
  #allocation3 [shape = 'f32[8,32]{1,0:T(8,128)}', space=vmem, size = 0x1000, scoped, tag = 'scratch operand']
  %s0 = inlined_call_operand.hbm [shape: f32[1,8,16], index: 0, kind: input, shape index: {}]
  %s1 = inlined_call_operand.hbm [shape: f32[8,32], index: 1, kind: input, shape index: {}]
  %s2 = inlined_call_operand.hbm [shape: f32[8,32], index: 2, kind: input, shape index: {}]
  %s3 = inlined_call_operand.hbm [shape: bf16[48,256], index: 3, kind: input, shape index: {}]
  %s4 = inlined_call_operand.vmem [shape: f32[1,128], index: 4, kind: input, shape index: {}]
  %s5 = inlined_call_operand.vmem [shape: f32[1,128], index: 5, kind: input, shape index: {}]
  %s6 = inlined_call_operand.vmem [shape: f32[1,128], index: 6, kind: input, shape index: {}]
  %s7 = inlined_call_operand.vmem [shape: f32[1,128], index: 7, kind: input, shape index: {}]
  %s8 = inlined_call_operand.vmem [shape: f32[1,128], index: 8, kind: input, shape index: {}]
  %s9 = inlined_call_operand.vmem [shape: f32[1,128], index: 9, kind: input, shape index: {}]
  %s10 = inlined_call_operand.vmem [shape: f32[1,32], index: 10, kind: input, shape index: {}]
  %s11 = inlined_call_operand.vmem [shape: f32[1,32], index: 11, kind: input, shape index: {}]
  %s12 = inlined_call_operand.hbm [shape: f32[1,8,128], index: 12, kind: output, shape index: {}]
  %s13 = sld [smem:[#allocation0]]
  $region78: #{tpu_custom_call.1} parent=0
    _
  %s15 = ssub.s32 1, %s13
  %s16 = scalar_select 0, %s15, %s13
  $region1: #{tpu_custom_call.1} parent=0
    #allocation4 [shape = 'u8[4096]{0}', space=vmem, size = 0x1000, scoped, tag = 'input window, operand 0, single buffered']
    #allocation5 [shape = 's32[1]{0}', space=sflag, size = 0x4, scoped, tag = 'scoped memory for tpu_custom_call.1']
    #allocation6 [shape = 's32[1]{0}', space=sflag, size = 0x4, scoped, tag = 'scoped memory for tpu_custom_call.1']
    #allocation7 [shape = 'u8[4096]{0}', space=vmem, size = 0x1000, scoped, tag = 'input window, operand 1, single buffered']
    #allocation8 [shape = 's32[1]{0}', space=sflag, size = 0x4, scoped, tag = 'scoped memory for tpu_custom_call.1']
    #allocation9 [shape = 'u8[4096]{0}', space=vmem, size = 0x1000, scoped, tag = 'input window, operand 2, single buffered']
    #allocation10 [shape = 'u8[24576]{0}', space=vmem, size = 0x6000, scoped, tag = 'input window, operand 3, single buffered']
    #allocation11 [shape = 's32[1]{0}', space=sflag, size = 0x4, scoped, tag = 'scoped memory for tpu_custom_call.1']
    #allocation12 [shape = 'u8[4096]{0}', space=vmem, size = 0x1000, scoped, tag = 'output window, operand 0, single buffered']
    %17 = vsyncpa [#allocation5], 0
    %18 = vsyncpa [#allocation8], 0
    %19 = vsyncpa [#allocation11], 0
    %20 = vsyncpa [#allocation6], 0
    // Predicated region
    $region2: #{tpu_custom_call.1} parent=1 // pred_check
      _
    $region3: #{tpu_custom_call.1} parent=1 // pred_check_branch
      %22 = sbr.rel (0) target = $region5
    $region4: #{tpu_custom_call.1} parent=1 // pred_region
      %s24 = ssub.s32 128, 128
      %25 = vsyncadd [#allocation5], %s24
      %s27 = sshll.u32 [#allocation4], 4
      %s28 = int_to_ptr.vmem [resolvable:$true] %s27
      %30 = dma.hbm_to_vmem [thread:$0]  %s0, 128, %s28, [#allocation5]
    $region5: #{tpu_custom_call.1} parent=1 // pred_fallthru
      _
    // Predicated region
    $region6: #{tpu_custom_call.1} parent=1 // pred_check
      _
    $region7: #{tpu_custom_call.1} parent=1 // pred_check_branch
      %32 = sbr.rel (0) target = $region9
    $region8: #{tpu_custom_call.1} parent=1 // pred_region
      %s34 = ssub.s32 128, 128
      %35 = vsyncadd [#allocation8], %s34
      %s37 = sshll.u32 [#allocation7], 4
      %s38 = int_to_ptr.vmem [resolvable:$true] %s37
      %40 = dma.hbm_to_vmem [thread:$0]  %s1, 128, %s38, [#allocation8]
    $region9: #{tpu_custom_call.1} parent=1 // pred_fallthru
      _
    // Predicated region
    $region10: #{tpu_custom_call.1} parent=1 // pred_check
      _
    $region11: #{tpu_custom_call.1} parent=1 // pred_check_branch
      %42 = sbr.rel (0) target = $region13
    $region12: #{tpu_custom_call.1} parent=1 // pred_region
      %s44 = ssub.s32 128, 128
      %45 = vsyncadd [#allocation8], %s44
      %s47 = sshll.u32 [#allocation9], 4
      %s48 = int_to_ptr.vmem [resolvable:$true] %s47
      %50 = dma.hbm_to_vmem [thread:$0]  %s2, 128, %s48, [#allocation8]
    $region13: #{tpu_custom_call.1} parent=1 // pred_fallthru
      _
    // Predicated region
    $region14: #{tpu_custom_call.1} parent=1 // pred_check
      _
    $region15: #{tpu_custom_call.1} parent=1 // pred_check_branch
      %52 = sbr.rel (0) target = $region17
    $region16: #{tpu_custom_call.1} parent=1 // pred_region
      %s54 = ssub.s32 768, 768
      %55 = vsyncadd [#allocation11], %s54
      %s56 = sshll.u32 [#allocation10], 4
      %s57 = int_to_ptr.vmem [resolvable:$true] %s56
      %62 = dma.hbm_to_vmem [thread:$0]  %s3, 768, %s57, [#allocation11], 128, 128, 8
    $region17: #{tpu_custom_call.1} parent=1 // pred_fallthru
      _
    // Predicated region
    $region18: #{tpu_custom_call.1} parent=1 // pred_check
      _
    $region19: #{tpu_custom_call.1} parent=1 // pred_check_branch
      %64 = sbr.rel (0) target = $region21
    $region20: #{tpu_custom_call.1} parent=1 // pred_region
      _
    $region21: #{tpu_custom_call.1} parent=1 // pred_fallthru
      _
    // Predicated region
    $region22: #{tpu_custom_call.1} parent=1 // pred_check
      _
    $region23: #{tpu_custom_call.1} parent=1 // pred_check_branch
      %66 = sbr.rel (0) target = $region25
    $region24: #{tpu_custom_call.1} parent=1 // pred_region
      _
    $region25: #{tpu_custom_call.1} parent=1 // pred_fallthru
      _
    // Predicated region
    $region26: #{tpu_custom_call.1} parent=1 // pred_check
      _
    $region27: #{tpu_custom_call.1} parent=1 // pred_check_branch
      %68 = sbr.rel (0) target = $region29
    $region28: #{tpu_custom_call.1} parent=1 // pred_region
      _
    $region29: #{tpu_custom_call.1} parent=1 // pred_fallthru
      _
    // Predicated region
    $region30: #{tpu_custom_call.1} parent=1 // pred_check
      _
    $region31: #{tpu_custom_call.1} parent=1 // pred_check_branch
      %70 = sbr.rel (0) target = $region33
    $region32: #{tpu_custom_call.1} parent=1 // pred_region
      _
    $region33: #{tpu_custom_call.1} parent=1 // pred_fallthru
      _
    // Predicated region
    $region34: #{tpu_custom_call.1} parent=1 // pred_check
      _
    $region35: #{tpu_custom_call.1} parent=1 // pred_check_branch
      %72 = sbr.rel (0) target = $region37
    $region36: #{tpu_custom_call.1} parent=1 // pred_region
      _
    $region37: #{tpu_custom_call.1} parent=1 // pred_fallthru
      _
    // Predicated region
    $region38: #{tpu_custom_call.1} parent=1 // pred_check
      _
    $region39: #{tpu_custom_call.1} parent=1 // pred_check_branch
      %74 = sbr.rel (0) target = $region41
    $region40: #{tpu_custom_call.1} parent=1 // pred_region
      _
    $region41: #{tpu_custom_call.1} parent=1 // pred_fallthru
      _
    // Predicated region
    $region42: #{tpu_custom_call.1} parent=1 // pred_check
      _
    $region43: #{tpu_custom_call.1} parent=1 // pred_check_branch
      %76 = sbr.rel (0) target = $region45
    $region44: #{tpu_custom_call.1} parent=1 // pred_region
      _
    $region45: #{tpu_custom_call.1} parent=1 // pred_fallthru
      _
    // Predicated region
    $region46: #{tpu_custom_call.1} parent=1 // pred_check
      _
    $region47: #{tpu_custom_call.1} parent=1 // pred_check_branch
      %78 = sbr.rel (0) target = $region49
    $region48: #{tpu_custom_call.1} parent=1 // pred_region
      _
    $region49: #{tpu_custom_call.1} parent=1 // pred_fallthru
      _
    // Predicated region
    $region50: #{tpu_custom_call.1} parent=1 // pred_check
      _
    $region51: #{tpu_custom_call.1} parent=1 // pred_check_branch
      %80 = sbr.rel (0) target = $region53
    $region52: #{tpu_custom_call.1} parent=1 // pred_region
      %81 = dma.done [#allocation5], 128
    $region53: #{tpu_custom_call.1} parent=1 // pred_fallthru
      _
    // Predicated region
    $region54: #{tpu_custom_call.1} parent=1 // pred_check
      _
    $region55: #{tpu_custom_call.1} parent=1 // pred_check_branch
      %83 = sbr.rel (0) target = $region57
    $region56: #{tpu_custom_call.1} parent=1 // pred_region
      %84 = dma.done [#allocation8], 128
    $region57: #{tpu_custom_call.1} parent=1 // pred_fallthru
      _
    // Predicated region
    $region58: #{tpu_custom_call.1} parent=1 // pred_check
      _
    $region59: #{tpu_custom_call.1} parent=1 // pred_check_branch
      %86 = sbr.rel (0) target = $region61
    $region60: #{tpu_custom_call.1} parent=1 // pred_region
      %87 = dma.done [#allocation8], 128
    $region61: #{tpu_custom_call.1} parent=1 // pred_fallthru
      _
    // Predicated region
    $region62: #{tpu_custom_call.1} parent=1 // pred_check
      _
    $region63: #{tpu_custom_call.1} parent=1 // pred_check_branch
      %89 = sbr.rel (0) target = $region65
    $region64: #{tpu_custom_call.1} parent=1 // pred_region
      %90 = dma.done [#allocation11], 768
    $region65: #{tpu_custom_call.1} parent=1 // pred_fallthru
      _
    %p92 = scmp.eq.s32.totalorder 0, 0
    // Predicated region
    $region66: #{tpu_custom_call.1} parent=1 // pred_check
      %p93 = pneg %p92
    $region67: #{tpu_custom_call.1} parent=1 // pred_check_branch
      %95 = sbr.rel (%p93) target = $region69
    $region68: #{tpu_custom_call.1} parent=1 // pred_region
      %v96 = vld [vmem:[#allocation7] sm:$0xff]
      %vm97 = vcmask 261120
      %98 = vst.msk [vmem:[#allocation2] sm:$0xff] %vm97, %v96
      %v99 = vld [vmem:[#allocation9] sm:$0xff]
      %100 = vst.msk [vmem:[#allocation3] sm:$0xff] %vm97, %v99
    $region69: #{tpu_custom_call.1} parent=1 // pred_fallthru
      _
    %v101 = vld [vmem:[#allocation4] sm:$0xff]
    %v102 = vld [vmem:[#allocation2] sm:$0xff]
    %104 = vrot.lane.b32.xlu0 %v102, 16
    %v105 = vpop.permute.xlu0 %104
    %vm107 = vcmask 130048
    %v108 = vsel %vm107, %v101, %v105
    %v109 = vpack.c.bf16 %v108, %v108
    %v110 = vld [vmem:[#allocation10] sm:$0xff]
    %v111 = vld [vmem:[#allocation10 + $0x8] sm:$0xff]
    %v112 = vld [vmem:[#allocation10 + $0x10] sm:$0xff]
    %v113 = vld [vmem:[#allocation10 + $0x18] sm:$0xff]
    %v114 = vld [vmem:[#allocation10 + $0x20] sm:$0xff]
    %v115 = vld [vmem:[#allocation10 + $0x28] sm:$0xff]
    %v122 = vunpack.c.l.b16 %v110
    %v123 = vunpack.c.h.b16 %v110
    %v124 = vunpack.c.l.b16 %v111
    %v125 = vunpack.c.h.b16 %v111
    %v126 = vunpack.c.l.b16 %v112
    %v127 = vunpack.c.h.b16 %v112
    %v128 = vunpack.c.l.b16 %v113
    %v129 = vunpack.c.h.b16 %v113
    %v130 = vunpack.c.l.b16 %v114
    %v131 = vunpack.c.h.b16 %v114
    %v132 = vunpack.c.l.b16 %v115
    %v133 = vunpack.c.h.b16 %v115
    %v134 = vpack.c.b16 %v124, %v122
    %v135 = vpack.c.b16 %v125, %v123
    %v136 = vpack.c.b16 %v128, %v126
    %v137 = vpack.c.b16 %v129, %v127
    %v138 = vpack.c.b16 %v132, %v130
    %v139 = vpack.c.b16 %v133, %v131
    %vm146 = vcmask 392192
    %v148 = vsel %vm146, %v109, 0
    %150 = vmatprep.subr.bf16.mxu0 0
    %151 = vmatpush1.bf16.msra.mxu0 0
    %152 = vmatprep.subr.bf16.mxu0 0
    %153 = vmatpush1.bf16.msra.mxu0 0
    %154 = vmatprep.subr.bf16.mxu0 0
    %155 = vmatpush1.bf16.msra.mxu0 0
    %156 = vmatprep.subr.bf16.mxu0 0
    %157 = vmatpush1.bf16.msra.mxu0 0
    %158 = vmatprep.subr.bf16.mxu0 0
    %159 = vmatpush1.bf16.msra.mxu0 0
    %160 = vmatprep.subr.bf16.mxu0 %v139
    %161 = vmatpush1.bf16.msra.mxu0 %v138
    %162 = vmatprep.subr.bf16.mxu0 %v137
    %163 = vmatpush1.bf16.msra.mxu0 %v136
    %164 = vmatprep.subr.bf16.mxu0 %v135
    %165 = vmatpush1.bf16.msra.mxu0 %v134
    %166 = vmatprep.subr.bf16.mxu0 0
    %167 = vmatpush2.bf16.msra.mxu0 0
    %168 = vmatprep.subr.bf16.mxu0 0
    %169 = vmatpush2.bf16.msra.mxu0 0
    %170 = vmatprep.subr.bf16.mxu0 0
    %171 = vmatpush2.bf16.msra.mxu0 0
    %172 = vmatprep.subr.bf16.mxu0 0
    %173 = vmatpush2.bf16.msra.mxu0 0
    %174 = vmatprep.subr.bf16.mxu0 0
    %175 = vmatpush2.bf16.msra.mxu0 0
    %176 = vmatprep.subr.bf16.mxu0 0
    %177 = vmatpush2.bf16.msra.mxu0 0
    %178 = vmatprep.subr.bf16.mxu0 0
    %179 = vmatpush2.bf16.msra.mxu0 0
    %180 = vmatprep.subr.bf16.mxu0 0
    %181 = vmatpush2.bf16.msra.mxu0 0
    %182 = vmatprep.mubr.bf16.mxu0 0
    %183 = vmatmul.mubr.bf16.gmra.mxu0 %v148
    %v184 = vpop.f32.mrf.mxu0
    %v185 = vadd.f32 0.0, %v184
    %v186 = vpop.f32.mrf.mxu0
    %v187 = vadd.f32 0.0, %v186
    %v188 = vpop.f32.mrf.mxu0
    %v189 = vpop.f32.mrf.mxu0
    %190 = vdwg.mxu0
    %v191 = vld [vmem:[%s4] sm:$0x1]
    %v193 = vlaneseq
    %v194 = vshrl.u32 %v193, 7
    %v195 = vsub.s32 0, %v194
    %v196 = vrot.slane %v191, %v195
    %v198 = vadd.f32 %v185, %v196
    %v199 = vld [vmem:[%s5] sm:$0x1]
    %v201 = vlaneseq
    %v202 = vshrl.u32 %v201, 7
    %v203 = vsub.s32 0, %v202
    %v204 = vrot.slane %v199, %v203
    %v206 = vadd.f32 %v187, %v204
    %v207 = vld [vmem:[%s6] sm:$0x1]
    %v208 = vld [vmem:[%s7] sm:$0x1]
    %209 = vadd.xlane.f32.xlu0 %v198
    %v210 = vpop.xlane.xlu0 %209
    %v211 = vrcp.pop 128.0
    %v212 = vmul.f32 %v210, %v211
    %v213 = vmul.f32 %v198, %v198
    %214 = vadd.xlane.f32.xlu0 %v213
    %v215 = vpop.xlane.xlu0 %214
    %v216 = vmul.f32 %v215, %v211
    %v217 = vmul.f32 %v212, %v212
    %v218 = vsub.f32 %v216, %v217
    %v219 = vmax.f32 %v218, 0.0
    %v220 = vadd.f32 %v219, 1e-05
    %v221 = vrsqrt.pop %v220
    %v222 = vsub.f32 %v198, %v212
    %v223 = vmul.f32 %v222, %v221
    %v225 = vlaneseq
    %v226 = vshrl.u32 %v225, 7
    %v227 = vsub.s32 0, %v226
    %v228 = vrot.slane %v207, %v227
    %v230 = vmul.f32 %v223, %v228
    %v232 = vlaneseq
    %v233 = vshrl.u32 %v232, 7
    %v234 = vsub.s32 0, %v233
    %v235 = vrot.slane %v208, %v234
    %v237 = vadd.f32 %v230, %v235
    %v238 = vld [vmem:[%s8] sm:$0x1]
    %v239 = vld [vmem:[%s9] sm:$0x1]
    %240 = vadd.xlane.f32.xlu0 %v206
    %v241 = vpop.xlane.xlu0 %240
    %v242 = vmul.f32 %v241, %v211
    %v243 = vmul.f32 %v206, %v206
    %244 = vadd.xlane.f32.xlu0 %v243
    %v245 = vpop.xlane.xlu0 %244
    %v246 = vmul.f32 %v245, %v211
    %v247 = vmul.f32 %v242, %v242
    %v248 = vsub.f32 %v246, %v247
    %v249 = vmax.f32 %v248, 0.0
    %v250 = vadd.f32 %v249, 1e-05
    %v251 = vrsqrt.pop %v250
    %v252 = vsub.f32 %v206, %v242
    %v253 = vmul.f32 %v252, %v251
    %v255 = vlaneseq
    %v256 = vshrl.u32 %v255, 7
    %v257 = vsub.s32 0, %v256
    %v258 = vrot.slane %v238, %v257
    %v260 = vmul.f32 %v253, %v258
    %v262 = vlaneseq
    %v263 = vshrl.u32 %v262, 7
    %v264 = vsub.s32 0, %v263
    %v265 = vrot.slane %v239, %v264
    %v267 = vadd.f32 %v260, %v265
    %v268 = vadd.f32 %v237, %v267
    %v269 = vxor.u32 %v268, 2147483648
    %v270 = vmul.f32 %v269, 1.442695
    %v271 = vpow.pop %v270
    %v272 = vadd.f32 %v271, 1.0
    %v273 = vrcp.pop %v272
    %v274 = vmul.f32 1.0, %v273
    %v275 = vtanh.pop %v268
    %v276 = vld [vmem:[#allocation3] sm:$0xff]
    %v277 = vmul.f32 %v274, %v276
    %279 = vrot.lane.b32.xlu0 %v275, 64
    %v280 = vpop.permute.xlu0 %279
    %v282 = vmul.f32 %v274, %v280
    %284 = vrot.lane.b32.xlu0 %v282, 96
    %v285 = vpop.permute.xlu0 %284
    %v287 = vadd.f32 %v277, %v285
    %v288 = vld [vmem:[%s10] sm:$0x1]
    %v289 = vld [vmem:[%s11] sm:$0x1]
    %vm290 = vcmask 261120
    %v291 = vsel %vm290, %v287, 0.0
    %292 = vadd.xlane.f32.xlu0 %v291
    %v293 = vpop.xlane.xlu0 %292
    %v294 = vrcp.pop 32.0
    %v295 = vmul.f32 %v293, %v294
    %v296 = vmul.f32 %v287, %v287
    %v297 = vsel %vm290, %v296, 0.0
    %298 = vadd.xlane.f32.xlu0 %v297
    %v299 = vpop.xlane.xlu0 %298
    %v300 = vmul.f32 %v299, %v294
    %v301 = vmul.f32 %v295, %v295
    %v302 = vsub.f32 %v300, %v301
    %v303 = vmax.f32 %v302, 0.0
    %v304 = vadd.f32 %v303, 1e-05
    %v305 = vrsqrt.pop %v304
    %v306 = vsub.f32 %v287, %v295
    %v307 = vmul.f32 %v306, %v305
    %v309 = vlaneseq
    %v310 = vshrl.u32 %v309, 7
    %v311 = vsub.s32 0, %v310
    %v312 = vrot.slane %v288, %v311
    %v314 = vmul.f32 %v307, %v312
    %v316 = vlaneseq
    %v317 = vshrl.u32 %v316, 7
    %v318 = vsub.s32 0, %v317
    %v319 = vrot.slane %v289, %v318
    %v321 = vadd.f32 %v314, %v319
    %v322 = vtanh.pop %v321
    %324 = vrot.lane.b32.xlu0 %v322, 64
    %v325 = vpop.permute.xlu0 %324
    %v327 = vmul.f32 %v274, %v325
    %329 = vrot.lane.b32.xlu0 %v327, 64
    %v330 = vpop.permute.xlu0 %329
    %332 = vst.msk [vmem:[#allocation2] sm:$0xff] %vm290, %v330
    %333 = vst.msk [vmem:[#allocation3] sm:$0xff] %vm290, %v287
    %335 = vrot.lane.b32.xlu0 %v287, 32
    %v336 = vpop.permute.xlu0 %335
    %v338 = vsel %vm290, %v330, %v336
    %vm339 = vcmask 523264
    %v340 = vsel %vm339, %v338, 0.0
    %341 = vst [vmem:[#allocation12] sm:$0xff] %v340
    // Predicated region
    $region70: #{tpu_custom_call.1} parent=1 // pred_check
      _
    $region71: #{tpu_custom_call.1} parent=1 // pred_check_branch
      %343 = sbr.rel (0) target = $region73
    $region72: #{tpu_custom_call.1} parent=1 // pred_region
      %s345 = ssub.s32 128, 128
      %346 = vsyncadd [#allocation6], %s345
      %s348 = sshll.u32 [#allocation12], 4
      %s349 = int_to_ptr.vmem [resolvable:$true] %s348
      %351 = dma.vmem_to_hbm [thread:$0]  %s349, 128, %s12, [#allocation6]
    $region73: #{tpu_custom_call.1} parent=1 // pred_fallthru
      _
    // Predicated region
    $region74: #{tpu_custom_call.1} parent=1 // pred_check
      _
    $region75: #{tpu_custom_call.1} parent=1 // pred_check_branch
      %353 = sbr.rel (0) target = $region77
    $region76: #{tpu_custom_call.1} parent=1 // pred_region
      %354 = dma.done [#allocation6], 128
    $region77: #{tpu_custom_call.1} parent=1 // pred_fallthru
      _
    %355 = vsyncpa [#allocation5], 1
    %356 = vsyncpa [#allocation8], 1
    %357 = vsyncpa [#allocation11], 1
    %358 = vsyncpa [#allocation6], 1

</llo_original>
